<compile_context>
chip_gen: v7x
topology: tpu7x:2x2x1
jax: 0.10.0
libtpu: 0.0.40
codegen_flags: <defaults>
</compile_context>

<pallas_src>
import functools

import jax
import jax.numpy as jnp
from jax import lax
from jax.experimental import pallas as pl
from jax.experimental.pallas import tpu as pltpu

_CHUNK = 512                   # in-kernel sub-chunk width (lanes); multiple of 128
_MAX_TILE = 8192               # max batch tile (lanes) per grid step
_XLA_FALLBACK_ELEMS = 1 << 16  # below this many activation elements, use plain XLA


def _round_up(n, m):
    return ((n + m - 1) // m) * m


def _linear_relu_kernel_o1(n_chunks, chunk, x_ref, w_ref, b_ref, o_ref):
    """O == 1 path: VPU broadcast-multiply + sublane (XLU) reduction, no MXU.

    x_ref: (D, tb) VMEM   activations, batch on lanes
    w_ref: (D, 1)  VMEM   weight column (resident across grid steps)
    b_ref: (1,)    SMEM   bias scalar
    o_ref: (1, tb) VMEM   output, batch on lanes (lane-dense store)
    """
    col = w_ref[...]      # (D, 1), loaded once per grid step
    bias = b_ref[0]       # scalar from SMEM

    def body(j, carry):
        start = pl.multiple_of(j * chunk, chunk)
        xc = x_ref[:, pl.ds(start, chunk)]                       # (D, chunk)
        h = jnp.sum(xc * col, axis=0, keepdims=True) + bias      # (1, chunk)
        o_ref[:, pl.ds(start, chunk)] = jnp.maximum(h, 0.0).astype(o_ref.dtype)
        return carry

    lax.fori_loop(0, n_chunks, body, None, unroll=True)


def _linear_relu_kernel_mxu(n_chunks, chunk, x_ref, w_ref, b_ref, o_ref):
    """O > 1 path: one MXU contraction per 512-lane sub-chunk.

    x_ref: (D, tb) VMEM   activations, batch on lanes
    w_ref: (O, D)  VMEM   weight in native layout (no wrapper transpose)
    b_ref: (O, 1)  VMEM   bias column
    o_ref: (O, tb) VMEM   lane-dense output
    """
    w = w_ref[...]        # (O, D)
    bias = b_ref[...]     # (O, 1)

    def body(j, carry):
        start = pl.multiple_of(j * chunk, chunk)
        xc = x_ref[:, pl.ds(start, chunk)]                                  # (D, chunk)
        h = jnp.dot(w, xc, preferred_element_type=jnp.float32) + bias       # (O, chunk)
        o_ref[:, pl.ds(start, chunk)] = jnp.maximum(h, 0.0).astype(o_ref.dtype)
        return carry

    lax.fori_loop(0, n_chunks, body, None, unroll=True)


def deepnn_avg_forward(x, w, b):
    """DeepNNAvg.forward (layercount=1): ReLU(x.T @ w.T + b).

    x: (input_dim, batch), w: (output_dim, input_dim), b: (output_dim,)
    Returns (batch, output_dim).
    """
    x = x.astype(jnp.float32)
    w = w.astype(jnp.float32)
    b = b.astype(jnp.float32)

    D, B = x.shape
    O = w.shape[0]

    # Tiny-problem fallback: at these sizes nothing inside a kernel moves perf —
    # the fixed Pallas launch/pipeline overhead dominates on every generation.
    if D * B < _XLA_FALLBACK_ELEMS:
        return jnp.maximum(w @ x + b[:, None], 0.0).T

    # Batch tile: whole batch when it fits one lane-aligned tile; otherwise aim for
    # >= 4 grid steps (v7x: both TensorCores participate; pipeline stays fed) while
    # growing each step's DMA up to ~1.9 MiB (tb = 8192 lanes max).
    if B <= _CHUNK:
        tb = B
    else:
        tb = _round_up(pl.cdiv(B, 4), 128)
        tb = min(max(tb, _CHUNK), _MAX_TILE)
        tb = _round_up(tb, _CHUNK)           # clean in-kernel sub-chunking
    grid = (pl.cdiv(B, tb),)

    # Sub-chunking keeps per-iteration live ranges to a few dozen vregs instead of
    # materializing the full (D, tb) block.
    if tb % _CHUNK == 0:
        n_chunks, chunk = tb // _CHUNK, _CHUNK
    else:
        n_chunks, chunk = 1, tb

    if O == 1:
        # (1, D) -> (D, 1) is a pure reshape of a contiguous vector: no relayout.
        kernel = functools.partial(_linear_relu_kernel_o1, n_chunks, chunk)
        w_arg = w.reshape(D, 1)
        w_spec = pl.BlockSpec((D, 1), lambda i: (0, 0))
        b_arg = b
        b_spec = pl.BlockSpec(memory_space=pltpu.MemorySpace.SMEM)
    else:
        # Keep w in its native (O, D) layout and contract on the MXU.
        kernel = functools.partial(_linear_relu_kernel_mxu, n_chunks, chunk)
        w_arg = w
        w_spec = pl.BlockSpec((O, D), lambda i: (0, 0))
        b_arg = b.reshape(O, 1)
        b_spec = pl.BlockSpec((O, 1), lambda i: (0, 0))

    out_ob = pl.pallas_call(
        kernel,
        out_shape=jax.ShapeDtypeStruct((O, B), jnp.float32),
        grid=grid,
        in_specs=[
            pl.BlockSpec((D, tb), lambda i: (0, i)),   # activations, batch on lanes
            w_spec,                                    # weight (resident)
            b_spec,                                    # bias
        ],
        out_specs=pl.BlockSpec((O, tb), lambda i: (0, i)),
        compiler_params=pltpu.CompilerParams(
            dimension_semantics=("parallel",)),
    )(x, w_arg, b_arg)

    # Module contract is (batch, output_dim).  For the default O == 1 this reshape
    # is free (no data movement); for O > 1 a single small (O, B) transpose remains.
    return out_ob.reshape(B, O) if O == 1 else out_ob.T


if __name__ == "__main__":
    key = jax.random.PRNGKey(0)

    def make_params(kw, kb, input_dim, output_dim):
        # PyTorch-style Linear init: U(-1/sqrt(fan_in), 1/sqrt(fan_in)).
        bound = 1.0 / (input_dim ** 0.5)
        w = jax.random.uniform(kw, (output_dim, input_dim), minval=-bound,
                               maxval=bound, dtype=jnp.float32)
        b = jax.random.uniform(kb, (output_dim,), minval=-bound,
                               maxval=bound, dtype=jnp.float32)
        return w, b

    def reference(x, w, b):
        return jnp.maximum(x.T @ w.T + b, 0.0)

    ok = True

    # Case 1: default module config (input_dim=60, output_dim=1) at a tiny batch.
    # Hits the XLA fallback path (pure launch-overhead regime).
    k1, k2, k3, key = jax.random.split(key, 4)
    x = jax.random.normal(k1, (60, 8), dtype=jnp.float32)
    w, b = make_params(k2, k3, 60, 1)
    out = deepnn_avg_forward(x, w, b)
    jax.block_until_ready(out)
    ok &= out.shape == (8, 1)
    ok &= bool(jnp.allclose(out, reference(x, w, b), atol=1e-4))

    # Case 2: default config at a batch large enough to hit the Pallas O == 1 path
    # (grid of 4 parallel steps, 512-lane tiles).
    k1, k2, k3, key = jax.random.split(key, 4)
    x = jax.random.normal(k1, (60, 2048), dtype=jnp.float32)
    w, b = make_params(k2, k3, 60, 1)
    out = deepnn_avg_forward(x, w, b)
    jax.block_until_ready(out)
    ok &= out.shape == (2048, 1)
    ok &= bool(jnp.allclose(out, reference(x, w, b), atol=1e-4))

    # Case 3: non-default output_dim > 1 exercises the Pallas MXU path.
    k1, k2, k3, key = jax.random.split(key, 4)
    x = jax.random.normal(k1, (60, 2048), dtype=jnp.float32)
    w, b = make_params(k2, k3, 60, 4)
    out = deepnn_avg_forward(x, w, b)
    jax.block_until_ready(out)
    ok &= out.shape == (2048, 4)
    ok &= bool(jnp.allclose(out, reference(x, w, b), atol=1e-4))

    assert ok, "mismatch vs reference"
    print("KERNEL_OK")
</pallas_src>

<mosaic_0001>
module attributes {stable_mosaic.version = 11 : i64} {
  func.func @_linear_relu_kernel_o1(%arg0: i32, %arg1: memref<60x512xf32, #tpu.memory_space<vmem>>, %arg2: memref<60x1xf32, #tpu.memory_space<vmem>>, %arg3: memref<1xf32, #tpu.memory_space<smem>>, %arg4: memref<1x512xf32, #tpu.memory_space<vmem>>) attributes {dimension_semantics = [#tpu.dimension_semantics<parallel>], iteration_bounds = array<i64: 4>, scalar_prefetch = 0 : i64, scratch_operands = 0 : i64, tpu.core_type = #tpu.core_type<tc>, window_params = [{transform_indices = @transform_0, window_bounds = array<i64: 60, 512>}, {pipeline_mode = #tpu.pipeline_mode<synchronous>, transform_indices = @transform_1, window_bounds = array<i64: 60, 1>}, {transform_indices = @transform_2, window_bounds = array<i64: 1>}, {transform_indices = @transform_3, window_bounds = array<i64: 1, 512>}]} {
    %c0 = arith.constant 0 : index
    %c0_0 = arith.constant 0 : index
    %0 = vector.load %arg2[%c0, %c0_0] : memref<60x1xf32, #tpu.memory_space<vmem>>, vector<60x1xf32>
    %c0_1 = arith.constant 0 : index
    %1 = memref.load %arg3[%c0_1] : memref<1xf32, #tpu.memory_space<smem>>
    %c0_i32 = arith.constant 0 : i32
    %c512_i32 = arith.constant 512 : i32
    %2 = arith.muli %c0_i32, %c512_i32 : i32
    %3 = tpu.assume_multiple %2, 512 : i32
    %c0_2 = arith.constant 0 : index
    %4 = arith.index_cast %3 : i32 to index
    %5 = vector.load %arg1[%c0_2, %4] : memref<60x512xf32, #tpu.memory_space<vmem>>, vector<60x512xf32>
    %6 = vector.broadcast %0 : vector<60x1xf32> to vector<60x512xf32>
    %7 = arith.mulf %5, %6 : vector<60x512xf32>
    %cst = arith.constant dense<0.000000e+00> : vector<512xf32>
    %8 = vector.multi_reduction <add>, %7, %cst [0] : vector<60x512xf32> to vector<512xf32>
    %9 = vector.shape_cast %8 : vector<512xf32> to vector<1x512xf32>
    %10 = vector.broadcast %1 : f32 to vector<1x512xf32>
    %11 = arith.addf %9, %10 : vector<1x512xf32>
    %cst_3 = arith.constant 0.000000e+00 : f32
    %12 = vector.broadcast %cst_3 : f32 to vector<1x512xf32>
    %13 = arith.maximumf %11, %12 : vector<1x512xf32>
    %c0_4 = arith.constant 0 : index
    %14 = arith.index_cast %3 : i32 to index
    %15 = vector.load %arg4[%c0_4, %14] : memref<1x512xf32, #tpu.memory_space<vmem>>, vector<1x512xf32>
    tpu.vector_store %arg4[%c0_4, %14], %13 {strides = array<i32>} : memref<1x512xf32, #tpu.memory_space<vmem>>, vector<1x512xf32>,
    %c1_i32 = arith.constant 1 : i32
    return
  }
  func.func @transform_0(%arg0: i32) -> (i32, i32) {
    %c0_i32 = arith.constant 0 : i32
    %c0_i32_0 = arith.constant 0 : i32
    return %c0_i32, %arg0 : i32, i32
  }
  func.func @transform_1(%arg0: i32) -> (i32, i32) {
    %c0_i32 = arith.constant 0 : i32
    %c0_i32_0 = arith.constant 0 : i32
    %c0_i32_1 = arith.constant 0 : i32
    return %c0_i32, %c0_i32_0 : i32, i32
  }
  func.func @transform_2(%arg0: i32) -> i32 {
    %c0_i32 = arith.constant 0 : i32
    %c0_i32_0 = arith.constant 0 : i32
    return %c0_i32 : i32
  }
  func.func @transform_3(%arg0: i32) -> (i32, i32) {
    %c0_i32 = arith.constant 0 : i32
    %c0_i32_0 = arith.constant 0 : i32
    return %c0_i32, %arg0 : i32, i32
  }
}

</mosaic_0001>

<llo_original>
// kernel: tpu_custom_call.1
$region0: #{tpu_custom_call.1}
  #allocation0 [shape = 'u32[]', space=smem, size = 0x4, offset = 0x4, fixed_abs, tag = 'smem constant byte address 0x4 - core index']
  #allocation1 [shape = 'u32[144,128]{1,0:T(1,128)}', space=vmem, size = 0x12000, scoped, tag = 'internal scratch']
  #allocation2 [shape = 'f32[1]{0:T(128)S(6)}', space=smem, size = 0x200, scoped, tag = 'scoped memory for tpu_custom_call.1']
  %s0 = inlined_call_operand.hbm [shape: f32[60,2048], index: 0, kind: input, shape index: {}]
  %s1 = inlined_call_operand.vmem [shape: f32[60,1], index: 1, kind: input, shape index: {}]
  %s2 = inlined_call_operand.<no memory space> [shape: f32[1], index: 2, kind: input, shape index: {}]
  %s3 = inlined_call_operand.hbm [shape: f32[1,2048], index: 3, kind: output, shape index: {}]
  %s4 = sld [smem:[#allocation0]]
  $region49: #{tpu_custom_call.1} parent=0
    _
  %s6 = ssub.s32 1, %s4
  %s7 = scalar_select 0, %s6, %s4
  %8 = sst [smem:[#allocation2]] %s2
  $region1: #{tpu_custom_call.1} parent=0
    #allocation3 [shape = 'u8[262144]{0}', space=vmem, size = 0x40000, scoped, tag = 'input window, operand 0']
    #allocation4 [shape = 's32[2]{0}', space=sflag, size = 0x8, scoped, tag = 'scoped memory for tpu_custom_call.1']
    #allocation5 [shape = 's32[2]{0}', space=sflag, size = 0x8, scoped, tag = 'scoped memory for tpu_custom_call.1']
    #allocation6 [shape = 'u8[4096]{0}', space=vmem, size = 0x1000, scoped, tag = 'output window, operand 0']
    %9 = vsyncpa [#allocation4], 0
    %s10 = scalar_lea.sflag [#allocation4], 1
    %11 = vsyncpa %s10, 0
    %12 = vsyncpa [#allocation5], 0
    %s13 = scalar_lea.sflag [#allocation5], 1
    %14 = vsyncpa %s13, 0
    loop: start=0, step=1, limit=6
    $region2: #{tpu_custom_call.1} parent=1 // loop_pre_header
      _
    $region3: #{tpu_custom_call.1} parent=1 // loop_header
      %s16 = sphi 0, %s20
      %p17 = scmp.ge.s32.totalorder %s16, 6
      %s26 = sphi 0, %s28
      %s29 = sphi 0, %s26
      %s30 = sphi 0, %s29
      %s46 = sphi 0, %s30
      %s50 = sphi 0, %s50
      %s52 = sphi 0, %s50
      %s53 = sphi 0, %s52
      %s67 = sphi 0, %s53
      %s71 = sphi 0, %s71
      %s73 = sphi 0, %s71
      %s74 = sphi 0, %s73
      %s88 = sphi 0, %s74
      %s94 = sphi 0, %s96
      %s97 = sphi 0, %s94
      %s98 = sphi 0, %s97
      %s114 = sphi 0, %s98
    $region4: #{tpu_custom_call.1} parent=1 // loop_header_branch
      %19 = sbr.rel (%p17) target = $region8
    $region5: #{tpu_custom_call.1} parent=1 // loop_body
      %s21 = ssub.s32 %s16, 1
      %s22 = ssub.s32 %s16, 2
      %s23 = sadd.s32 %s16, 1
      %s24 = ssub.s32 %s16, %s23
      %p25 = scmp.eq.s32.totalorder %s24, 0
      %s27 = sadd.s32 %s26, 1
      %s28 = scalar_select %p25, %s26, %s27
      %p31 = pneg %p25
      %p32 = scmp.eq.s32.totalorder %s16, 3
      %p33 = por %p31, %p32
      %p34 = scmp.ne.s32.totalorder %s26, %s29
      %p35 = scmp.eq.s32.totalorder %s16, 0
      %p36 = por %p34, %p35
      %p37 = scmp.ne.s32.totalorder %s26, %s29
      %p38 = scmp.eq.s32.totalorder %s21, 3
      %p39 = por %p37, %p38
      %p40 = scmp.ne.s32.totalorder %s29, %s30
      %p41 = scmp.eq.s32.totalorder %s21, 0
      %p42 = por %p40, %p41
      %p43 = scmp.ne.s32.totalorder %s29, %s30
      %p44 = scmp.eq.s32.totalorder %s22, 3
      %p45 = por %p43, %p44
      %p47 = scmp.ne.s32.totalorder %s30, %s46
      %p48 = scmp.eq.s32.totalorder %s22, 0
      %p49 = por %p47, %p48
      %s51 = sadd.s32 %s50, 1
      %p54 = scmp.eq.s32.totalorder %s16, 3
      %p55 = scmp.ne.s32.totalorder %s50, %s52
      %p56 = scmp.eq.s32.totalorder %s16, 0
      %p57 = por %p55, %p56
      %p58 = scmp.ne.s32.totalorder %s50, %s52
      %p59 = scmp.eq.s32.totalorder %s21, 3
      %p60 = por %p58, %p59
      %p61 = scmp.ne.s32.totalorder %s52, %s53
      %p62 = scmp.eq.s32.totalorder %s21, 0
      %p63 = por %p61, %p62
      %p64 = scmp.ne.s32.totalorder %s52, %s53
      %p65 = scmp.eq.s32.totalorder %s22, 3
      %p66 = por %p64, %p65
      %p68 = scmp.ne.s32.totalorder %s53, %s67
      %p69 = scmp.eq.s32.totalorder %s22, 0
      %p70 = por %p68, %p69
      %s72 = sadd.s32 %s71, 1
      %p75 = scmp.eq.s32.totalorder %s16, 3
      %p76 = scmp.ne.s32.totalorder %s71, %s73
      %p77 = scmp.eq.s32.totalorder %s16, 0
      %p78 = por %p76, %p77
      %p79 = scmp.ne.s32.totalorder %s71, %s73
      %p80 = scmp.eq.s32.totalorder %s21, 3
      %p81 = por %p79, %p80
      %p82 = scmp.ne.s32.totalorder %s73, %s74
      %p83 = scmp.eq.s32.totalorder %s21, 0
      %p84 = por %p82, %p83
      %p85 = scmp.ne.s32.totalorder %s73, %s74
      %p86 = scmp.eq.s32.totalorder %s22, 3
      %p87 = por %p85, %p86
      %p89 = scmp.ne.s32.totalorder %s74, %s88
      %p90 = scmp.eq.s32.totalorder %s22, 0
      %p91 = por %p89, %p90
      %s92 = ssub.s32 %s16, %s23
      %p93 = scmp.eq.s32.totalorder %s92, 0
      %s95 = sadd.s32 %s94, 1
      %s96 = scalar_select %p93, %s94, %s95
      %p99 = pneg %p93
      %p100 = scmp.eq.s32.totalorder %s16, 3
      %p101 = por %p99, %p100
      %p102 = scmp.ne.s32.totalorder %s94, %s97
      %p103 = scmp.eq.s32.totalorder %s16, 0
      %p104 = por %p102, %p103
      %p105 = scmp.ne.s32.totalorder %s94, %s97
      %p106 = scmp.eq.s32.totalorder %s21, 3
      %p107 = por %p105, %p106
      %p108 = scmp.ne.s32.totalorder %s97, %s98
      %p109 = scmp.eq.s32.totalorder %s21, 0
      %p110 = por %p108, %p109
      %p111 = scmp.ne.s32.totalorder %s97, %s98
      %p112 = scmp.eq.s32.totalorder %s22, 3
      %p113 = por %p111, %p112
      %p115 = scmp.ne.s32.totalorder %s98, %s114
      %p116 = scmp.eq.s32.totalorder %s22, 0
      %p117 = por %p115, %p116
      %p118 = scmp.le.s32.totalorder 1, %s16
      %p119 = scmp.lt.s32.totalorder %s16, 5
      %p120 = pnand %p118, %p119
      %p121 = pneg %p120
      // Predicated region
      $region9: #{tpu_custom_call.1} parent=5 // pred_check
        _
      $region10: #{tpu_custom_call.1} parent=5 // pred_check_branch
        %123 = sbr.rel (%p120) target = $region12
      $region11: #{tpu_custom_call.1} parent=5 // pred_region
        %s124 = ssub.s32 %s16, 1
        // Predicated region
        $region13: #{tpu_custom_call.1} parent=11 // pred_check
          %p125 = pneg %p63
        $region14: #{tpu_custom_call.1} parent=11 // pred_check_branch
          %127 = sbr.rel (%p125) target = $region16
        $region15: #{tpu_custom_call.1} parent=11 // pred_region
          _
        $region16: #{tpu_custom_call.1} parent=11 // pred_fallthru
          _
        // Predicated region
        $region17: #{tpu_custom_call.1} parent=11 // pred_check
          %p128 = pneg %p84
        $region18: #{tpu_custom_call.1} parent=11 // pred_check_branch
          %130 = sbr.rel (%p128) target = $region20
        $region19: #{tpu_custom_call.1} parent=11 // pred_region
          _
        $region20: #{tpu_custom_call.1} parent=11 // pred_fallthru
          _
      $region12: #{tpu_custom_call.1} parent=5 // pred_fallthru
        _
      %p131 = scmp.lt.s32.totalorder %s16, 4
      // Predicated region
      $region21: #{tpu_custom_call.1} parent=5 // pred_check
        %p132 = pneg %p131
      $region22: #{tpu_custom_call.1} parent=5 // pred_check_branch
        %134 = sbr.rel (%p132) target = $region24
      $region23: #{tpu_custom_call.1} parent=5 // pred_region
        // Predicated region
        $region25: #{tpu_custom_call.1} parent=23 // pred_check
          %p135 = pneg %p36
        $region26: #{tpu_custom_call.1} parent=23 // pred_check_branch
          %137 = sbr.rel (%p135) target = $region28
        $region27: #{tpu_custom_call.1} parent=23 // pred_region
          %s138 = sand.u32 %s26, 1
          %s139 = scalar_lea.sflag [#allocation4], %s138
          %s140 = sand.u32 %s26, 1
          %s141 = smul.addr %s140, 256
          %s142 = scalar_lea.vmem [#allocation3], %s141
          %s143 = smul.u32 4, %s16
          %s145 = ssub.s32 4096, 4096
          %146 = vsyncadd %s139, %s145
          %s147 = smul.addr %s143, 128
          %s148 = scalar_lea.hbm %s0, %s147
          %s149 = sshll.u32 %s142, 4
          %s150 = int_to_ptr.vmem [resolvable:$true] %s149
          %155 = dma.hbm_to_vmem [thread:$0]  %s148, 4096, %s150, %s139, 2048, 512, 32
        $region28: #{tpu_custom_call.1} parent=23 // pred_fallthru
          _
      $region24: #{tpu_custom_call.1} parent=5 // pred_fallthru
        _
      %p156 = scmp.le.s32.totalorder 1, %s16
      %p157 = scmp.lt.s32.totalorder %s16, 5
      %p158 = pnand %p156, %p157
      %p159 = pneg %p158
      // Predicated region
      $region29: #{tpu_custom_call.1} parent=5 // pred_check
        _
      $region30: #{tpu_custom_call.1} parent=5 // pred_check_branch
        %161 = sbr.rel (%p158) target = $region32
      $region31: #{tpu_custom_call.1} parent=5 // pred_region
        %s162 = ssub.s32 %s16, 1
        %s163 = sand.u32 %s29, 1
        %s164 = scalar_lea.sflag [#allocation4], %s163
        %s165 = sand.u32 %s29, 1
        %s166 = smul.addr %s165, 256
        %s167 = scalar_lea.vmem [#allocation3], %s166
        // Predicated region
        $region33: #{tpu_custom_call.1} parent=31 // pred_check
          %p168 = pneg %p42
        $region34: #{tpu_custom_call.1} parent=31 // pred_check_branch
          %170 = sbr.rel (%p168) target = $region36
        $region35: #{tpu_custom_call.1} parent=31 // pred_region
          %171 = dma.done %s164, 4096
        $region36: #{tpu_custom_call.1} parent=31 // pred_fallthru
          _
        %s172 = sand.u32 %s29, 1
        %s173 = scalar_lea.sflag [#allocation4], %s172
        %s174 = sand.u32 %s29, 1
        %s175 = smul.addr %s174, 256
        %s176 = scalar_lea.vmem [#allocation3], %s175
        %p177 = pneg %p42
        %p178 = pneg %p39
        %p179 = pneg %p63
        %p180 = pneg %p60
        %p181 = pneg %p84
        %p182 = pneg %p81
        %p183 = pneg %p110
        %p184 = pneg %p107
        %s185 = sand.u32 %s97, 1
        %s186 = scalar_lea.sflag [#allocation5], %s185
        %s187 = sand.u32 %s97, 1
        %s188 = smul.addr %s187, 4
        %s189 = scalar_lea.vmem [#allocation6], %s188
        %s190 = smul.u32 4, %s21
        %s191 = smul.u32 4, %s21
        %v192 = vld [vmem:[%s1] sm:$0xff]
        %v193 = vld [vmem:[%s1 + $0x8] sm:$0xff]
        %v194 = vld [vmem:[%s1 + $0x10] sm:$0xff]
        %v195 = vld [vmem:[%s1 + $0x18] sm:$0xff]
        %v196 = vld [vmem:[%s1 + $0x20] sm:$0xff]
        %v197 = vld [vmem:[%s1 + $0x28] sm:$0xff]
        %v198 = vld [vmem:[%s1 + $0x30] sm:$0xff]
        %v199 = vld [vmem:[%s1 + $0x38] sm:$0xf]
        %s200 = sld [smem:[#allocation2]]
        %v201 = vld [vmem:[%s167] sm:$0xff]
        %v202 = vld [vmem:[%s167 + $0x8] sm:$0xff]
        %v203 = vld [vmem:[%s167 + $0x10] sm:$0xff]
        %v204 = vld [vmem:[%s167 + $0x18] sm:$0xff]
        %v205 = vld [vmem:[%s167 + $0x20] sm:$0xff]
        %v206 = vld [vmem:[%s167 + $0x28] sm:$0xff]
        %v207 = vld [vmem:[%s167 + $0x30] sm:$0xff]
        %v208 = vld [vmem:[%s167 + $0x38] sm:$0xff]
        %v209 = vld [vmem:[%s167 + $0x40] sm:$0xff]
        %v210 = vld [vmem:[%s167 + $0x48] sm:$0xff]
        %v211 = vld [vmem:[%s167 + $0x50] sm:$0xff]
        %v212 = vld [vmem:[%s167 + $0x58] sm:$0xff]
        %v213 = vld [vmem:[%s167 + $0x60] sm:$0xff]
        %v214 = vld [vmem:[%s167 + $0x68] sm:$0xff]
        %v215 = vld [vmem:[%s167 + $0x70] sm:$0xff]
        %v216 = vld [vmem:[%s167 + $0x78] sm:$0xff]
        %v217 = vld [vmem:[%s167 + $0x80] sm:$0xff]
        %v218 = vld [vmem:[%s167 + $0x88] sm:$0xff]
        %v219 = vld [vmem:[%s167 + $0x90] sm:$0xff]
        %v220 = vld [vmem:[%s167 + $0x98] sm:$0xff]
        %v221 = vld [vmem:[%s167 + $0xa0] sm:$0xff]
        %v222 = vld [vmem:[%s167 + $0xa8] sm:$0xff]
        %v223 = vld [vmem:[%s167 + $0xb0] sm:$0xff]
        %v224 = vld [vmem:[%s167 + $0xb8] sm:$0xff]
        %v225 = vld [vmem:[%s167 + $0xc0] sm:$0xff]
        %v226 = vld [vmem:[%s167 + $0xc8] sm:$0xff]
        %v227 = vld [vmem:[%s167 + $0xd0] sm:$0xff]
        %v228 = vld [vmem:[%s167 + $0xd8] sm:$0xff]
        %v229 = vld [vmem:[%s167 + $0xe0] sm:$0xf]
        %v230 = vld [vmem:[%s167 + $0xe8] sm:$0xf]
        %v231 = vld [vmem:[%s167 + $0xf0] sm:$0xf]
        %v232 = vld [vmem:[%s167 + $0xf8] sm:$0xf]
        %234 = vset.pattern.permute.xlu0 0
        %235 = vperm.xlu0 %234, %v192
        %v236 = vpop.permute.xlu0 %235
        %239 = vset.pattern.permute.xlu0 0
        %240 = vperm.xlu0 %239, %v193
        %v241 = vpop.permute.xlu0 %240
        %244 = vset.pattern.permute.xlu0 0
        %245 = vperm.xlu0 %244, %v194
        %v246 = vpop.permute.xlu0 %245
        %249 = vset.pattern.permute.xlu0 0
        %250 = vperm.xlu0 %249, %v195
        %v251 = vpop.permute.xlu0 %250
        %254 = vset.pattern.permute.xlu0 0
        %255 = vperm.xlu0 %254, %v196
        %v256 = vpop.permute.xlu0 %255
        %259 = vset.pattern.permute.xlu0 0
        %260 = vperm.xlu0 %259, %v197
        %v261 = vpop.permute.xlu0 %260
        %264 = vset.pattern.permute.xlu0 0
        %265 = vperm.xlu0 %264, %v198
        %v266 = vpop.permute.xlu0 %265
        %269 = vset.pattern.permute.xlu0 0
        %270 = vperm.xlu0 %269, %v199
        %v271 = vpop.permute.xlu0 %270
        %v273 = vmul.f32 %v201, %v236
        %v274 = vmul.f32 %v202, %v236
        %v275 = vmul.f32 %v203, %v236
        %v276 = vmul.f32 %v204, %v236
        %v277 = vmul.f32 %v205, %v241
        %v278 = vmul.f32 %v206, %v241
        %v279 = vmul.f32 %v207, %v241
        %v280 = vmul.f32 %v208, %v241
        %v281 = vmul.f32 %v209, %v246
        %v282 = vmul.f32 %v210, %v246
        %v283 = vmul.f32 %v211, %v246
        %v284 = vmul.f32 %v212, %v246
        %v285 = vmul.f32 %v213, %v251
        %v286 = vmul.f32 %v214, %v251
        %v287 = vmul.f32 %v215, %v251
        %v288 = vmul.f32 %v216, %v251
        %v289 = vmul.f32 %v217, %v256
        %v290 = vmul.f32 %v218, %v256
        %v291 = vmul.f32 %v219, %v256
        %v292 = vmul.f32 %v220, %v256
        %v293 = vmul.f32 %v221, %v261
        %v294 = vmul.f32 %v222, %v261
        %v295 = vmul.f32 %v223, %v261
        %v296 = vmul.f32 %v224, %v261
        %v297 = vmul.f32 %v225, %v266
        %v298 = vmul.f32 %v226, %v266
        %v299 = vmul.f32 %v227, %v266
        %v300 = vmul.f32 %v228, %v266
        %v301 = vmul.f32 %v229, %v271
        %v302 = vmul.f32 %v230, %v271
        %v303 = vmul.f32 %v231, %v271
        %v304 = vmul.f32 %v232, %v271
        %v305 = vadd.f32 %v273, %v277
        %v306 = vadd.f32 %v305, %v281
        %v307 = vadd.f32 %v306, %v285
        %v308 = vadd.f32 %v307, %v289
        %v309 = vadd.f32 %v308, %v293
        %v310 = vadd.f32 %v309, %v297
        %vm311 = vcmask 1043456
        %v312 = vsel %vm311, %v301, 0.0
        %v313 = vadd.f32 %v310, %v312
        %v314 = vrot.slane %v313, 4
        %v315 = vadd.f32 %v313, %v314
        %v316 = vrot.slane %v315, 2
        %v317 = vadd.f32 %v315, %v316
        %v318 = vrot.slane %v317, 1
        %v319 = vadd.f32 %v317, %v318
        %v320 = vadd.f32 %v274, %v278
        %v321 = vadd.f32 %v320, %v282
        %v322 = vadd.f32 %v321, %v286
        %v323 = vadd.f32 %v322, %v290
        %v324 = vadd.f32 %v323, %v294
        %v325 = vadd.f32 %v324, %v298
        %v326 = vsel %vm311, %v302, 0.0
        %v327 = vadd.f32 %v325, %v326
        %v328 = vrot.slane %v327, 4
        %v329 = vadd.f32 %v327, %v328
        %v330 = vrot.slane %v329, 2
        %v331 = vadd.f32 %v329, %v330
        %v332 = vrot.slane %v331, 1
        %v333 = vadd.f32 %v331, %v332
        %v334 = vadd.f32 %v275, %v279
        %v335 = vadd.f32 %v334, %v283
        %v336 = vadd.f32 %v335, %v287
        %v337 = vadd.f32 %v336, %v291
        %v338 = vadd.f32 %v337, %v295
        %v339 = vadd.f32 %v338, %v299
        %v340 = vsel %vm311, %v303, 0.0
        %v341 = vadd.f32 %v339, %v340
        %v342 = vrot.slane %v341, 4
        %v343 = vadd.f32 %v341, %v342
        %v344 = vrot.slane %v343, 2
        %v345 = vadd.f32 %v343, %v344
        %v346 = vrot.slane %v345, 1
        %v347 = vadd.f32 %v345, %v346
        %v348 = vadd.f32 %v276, %v280
        %v349 = vadd.f32 %v348, %v284
        %v350 = vadd.f32 %v349, %v288
        %v351 = vadd.f32 %v350, %v292
        %v352 = vadd.f32 %v351, %v296
        %v353 = vadd.f32 %v352, %v300
        %v354 = vsel %vm311, %v304, 0.0
        %v355 = vadd.f32 %v353, %v354
        %v356 = vrot.slane %v355, 4
        %v357 = vadd.f32 %v355, %v356
        %v358 = vrot.slane %v357, 2
        %v359 = vadd.f32 %v357, %v358
        %v360 = vrot.slane %v359, 1
        %v361 = vadd.f32 %v359, %v360
        %v362 = vstv %s200
        %v363 = vadd.f32 %v319, %v362
        %v364 = vadd.f32 %v333, %v362
        %v365 = vadd.f32 %v347, %v362
        %v366 = vadd.f32 %v361, %v362
        %v367 = vmax.f32 %v363, 0.0
        %v368 = vmax.f32 %v364, 0.0
        %v369 = vmax.f32 %v365, 0.0
        %v370 = vmax.f32 %v366, 0.0
        %v375 = vcombine.low %v367, %v368
        %v376 = vcombine.low %v369, %v370
        %v378 = vunpack.c.l.s4 1966171168
        %v379 = vunpack.c.0.s8 %v378
        %v380 = vlaneseq
        %v381 = vshrl.u32 %v380, 7
        %v382 = vsub.s32 %v379, %v381
        %v383 = vrot.slane %v375, %v382
        %v385 = vunpack.c.l.s4 1966171168
        %v386 = vunpack.c.0.s8 %v385
        %v387 = vlaneseq
        %v388 = vshrl.u32 %v387, 7
        %v389 = vsub.s32 %v386, %v388
        %v390 = vrot.slane %v376, %v389
        %v391 = vcombine.low %v383, %v390
        %v393 = vunpack.c.l.s4 1966171168
        %v394 = vunpack.c.0.s8 %v393
        %v395 = vlaneseq
        %v396 = vshrl.u32 %v395, 7
        %v397 = vsub.s32 %v394, %v396
        %v398 = vrot.slane %v391, %v397
        %v400 = vlaneseq
        %vm401 = vcmp.ge.s32.totalorder %v400, 0
        %vm402 = vcmp.lt.s32.totalorder %v400, 512
        %vm403 = vmand %vm401, %vm402
        %404 = vst.msk [vmem:[%s189] sm:$0xf] %vm403, %v398
        %s405 = sand.u32 %s97, 1
        %s406 = scalar_lea.sflag [#allocation5], %s405
        %s407 = sand.u32 %s97, 1
        %s408 = smul.addr %s407, 4
        %s409 = scalar_lea.vmem [#allocation6], %s408
        // Predicated region
        $region37: #{tpu_custom_call.1} parent=31 // pred_check
          %p410 = pneg %p107
        $region38: #{tpu_custom_call.1} parent=31 // pred_check_branch
          %412 = sbr.rel (%p410) target = $region40
        $region39: #{tpu_custom_call.1} parent=31 // pred_region
          %s413 = smul.u32 4, %s21
          %s415 = ssub.s32 64, 64
          %416 = vsyncadd %s406, %s415
          %s417 = smul.addr %s413, 16
          %s418 = scalar_lea.hbm %s3, %s417
          %s420 = sshll.u32 %s409, 4
          %s421 = int_to_ptr.vmem [resolvable:$true] %s420
          %423 = dma.vmem_to_hbm [thread:$0]  %s421, 64, %s418, %s406
        $region40: #{tpu_custom_call.1} parent=31 // pred_fallthru
          _
      $region32: #{tpu_custom_call.1} parent=5 // pred_fallthru
        _
      %p424 = scmp.le.s32.totalorder 2, %s16
      // Predicated region
      $region41: #{tpu_custom_call.1} parent=5 // pred_check
        %p425 = pneg %p424
      $region42: #{tpu_custom_call.1} parent=5 // pred_check_branch
        %427 = sbr.rel (%p425) target = $region44
      $region43: #{tpu_custom_call.1} parent=5 // pred_region
        %s428 = ssub.s32 %s16, 2
        // Predicated region
        $region45: #{tpu_custom_call.1} parent=43 // pred_check
          %p429 = pneg %p113
        $region46: #{tpu_custom_call.1} parent=43 // pred_check_branch
          %431 = sbr.rel (%p429) target = $region48
        $region47: #{tpu_custom_call.1} parent=43 // pred_region
          %s432 = sand.u32 %s98, 1
          %s433 = scalar_lea.sflag [#allocation5], %s432
          %s434 = sand.u32 %s98, 1
          %s435 = smul.addr %s434, 4
          %s436 = scalar_lea.vmem [#allocation6], %s435
          %437 = dma.done %s433, 64
        $region48: #{tpu_custom_call.1} parent=43 // pred_fallthru
          _
      $region44: #{tpu_custom_call.1} parent=5 // pred_fallthru
        _
    $region6: #{tpu_custom_call.1} parent=1 // loop_footer
      %s20 = sadd.s32 1, %s16
    $region7: #{tpu_custom_call.1} parent=1 // loop_footer_branch
      %15 = sbr.rel target = $region3
    $region8: #{tpu_custom_call.1} parent=1 // loop_exit
      _
    %438 = vsyncpa [#allocation4], 1
    %s439 = scalar_lea.sflag [#allocation4], 1
    %440 = vsyncpa %s439, 1
    %441 = vsyncpa [#allocation5], 1
    %s442 = scalar_lea.sflag [#allocation5], 1
    %443 = vsyncpa %s442, 1

</llo_original>
